<compile_context>
chip_gen: v7x
topology: tpu7x:2x2x1
jax: 0.10.0
libtpu: 0.0.40
codegen_flags: <defaults>
</compile_context>

<pallas_src>
import functools
from typing import NamedTuple

import jax
import jax.numpy as jnp
from jax.experimental import pallas as pl
from jax.experimental.pallas import tpu as pltpu


def _round_up(x: int, m: int) -> int:
    return ((x + m - 1) // m) * m


def _vmem_capacity_bytes() -> int:
    # Per-core VMEM; conservative fallback (v7x per-TC size) if the query fails.
    try:
        return int(pltpu.get_tpu_info().vmem_capacity_bytes)
    except Exception:
        return 64 << 20


class BartClsHeadParams(NamedTuple):
    """out_proj parameters, pre-transformed once at model init so the per-call
    path carries no transpose/pad/cast HLOs (and no extra HBM round trips)."""
    w_t: jax.Array            # (D, Cp): weight.T with C zero-padded to Cp (mult of 128)
    b2d: jax.Array            # (1, Cp): float32 bias, zero-padded
    num_classes: int
    compute_dtype: object     # None => keep native dtype (f32-exact); jnp.bfloat16 opt-in


def prepare_bart_classification_head_params(weight, bias, *, compute_dtype=None):
    """weight: [C, D] (nn.Linear layout), bias: [C].

    compute_dtype=None keeps the native dtype (exact results for f32 params);
    pass jnp.bfloat16 to opt in to bf16 MXU compute (documented precision loss).
    """
    C, D = weight.shape
    assert bias.shape == (C,)
    Cp = _round_up(max(C, 1), 128)                    # lane-dense output / RHS
    w_dtype = compute_dtype if compute_dtype is not None else weight.dtype
    w_t = jnp.pad(weight.T.astype(w_dtype), ((0, 0), (0, Cp - C)))
    b2d = jnp.pad(bias.astype(jnp.float32), (0, Cp - C)).reshape(1, Cp)
    return BartClsHeadParams(w_t, b2d, C, compute_dtype)


def _cls_head_kernel(x_ref, w_ref, b_ref, o_ref, *, compute_dtype):
    # x_ref: (tm, D) native dtype; w_ref: (D, Cp); b_ref: (1, Cp) f32;
    # o_ref: (tm, Cp) native dtype.
    x = x_ref[...]
    if compute_dtype is not None:
        x = x.astype(compute_dtype)        # VPU cast, hides under the x DMA
    acc = jnp.dot(x, w_ref[...], preferred_element_type=jnp.float32)
    o_ref[...] = (acc + b_ref[...]).astype(o_ref.dtype)


def _choose_tile_m(N, D, Cp, x_itemsize, o_itemsize, tile_m, vmem_cap):
    # Budget ~1/3 of per-core VMEM for the double-buffered x + out tiles.
    budget = max(vmem_cap // 3, 8 << 20)
    per_row = 2 * D * x_itemsize + 2 * Cp * o_itemsize
    cap = max(128, (budget // per_row) // 128 * 128)
    tm = max(8, min(tile_m, cap))
    # Keep >= 2 row tiles for mid/large N so ("parallel",) can shard the grid
    # across both TensorCores on v7x (per-TC HBM bandwidth); harmless elsewhere.
    if N > 256:
        tm = min(tm, _round_up(pl.cdiv(N, 2), 128))
    if N <= tm:
        tm = _round_up(N, 8)               # single (possibly partial) block
    else:
        tm = _round_up(tm, 128)
    return tm


def _run_pallas(x, w_t, b2d, *, tm, compute_dtype, vmem_limit, single_buffer_resident):
    N, D = x.shape
    Cp = w_t.shape[1]

    def resident_spec(shape):
        if single_buffer_resident:
            # Constant index_map => operand never changes across the grid;
            # double-buffering it only wastes VMEM and an extra init DMA.
            return pl.BlockSpec(shape, lambda i: (0, 0), pipeline_mode=pl.Buffered(1))
        return pl.BlockSpec(shape, lambda i: (0, 0))

    kernel = functools.partial(_cls_head_kernel, compute_dtype=compute_dtype)
    return pl.pallas_call(
        kernel,
        out_shape=jax.ShapeDtypeStruct((N, Cp), x.dtype),
        grid_spec=pltpu.PrefetchScalarGridSpec(
            num_scalar_prefetch=0,
            grid=(pl.cdiv(N, tm),),
            in_specs=[
                pl.BlockSpec((tm, D), lambda i: (i, 0)),   # x row tiles, native dtype
                resident_spec((D, Cp)),                    # full W^T (resident)
                resident_spec((1, Cp)),                    # bias (resident, f32)
            ],
            out_specs=pl.BlockSpec((tm, Cp), lambda i: (i, 0)),
        ),
        compiler_params=pltpu.CompilerParams(
            dimension_semantics=("parallel",),             # row tiles shard across TCs
            vmem_limit_bytes=vmem_limit,
        ),
    )(x, w_t, b2d)


def bart_classification_head(hidden_states, params: BartClsHeadParams, *,
                             tile_m: int = 2048,
                             allow_xla_fallback: bool = True,
                             small_problem_elems: int = 16384):
    """hidden_states: [N, D] -> logits [N, num_classes].

    Inference-mode forward of BartClassificationHead (dropout == identity).
    """
    N, D = hidden_states.shape
    w_t, b2d, C, compute_dtype = params
    assert w_t.shape[0] == D

    # Tiny problems: launch/pipeline overhead dominates; one fused XLA dot wins.
    if allow_xla_fallback and (N == 0 or N * D <= small_problem_elems):
        xc = hidden_states if compute_dtype is None else hidden_states.astype(compute_dtype)
        out = jnp.dot(xc, w_t[:, :C], preferred_element_type=jnp.float32) + b2d[0, :C]
        return out.astype(hidden_states.dtype)

    Cp = w_t.shape[1]
    x_itemsize = hidden_states.dtype.itemsize
    o_itemsize = hidden_states.dtype.itemsize
    vmem_cap = _vmem_capacity_bytes()
    tm = _choose_tile_m(N, D, Cp, x_itemsize, o_itemsize, tile_m, vmem_cap)

    # Scoped-VMEM limit: double-buffered x/out tiles + resident W^T/bias with
    # headroom, capped at 3/4 of physical per-core VMEM (generation-aware:
    # ~48 MiB on v7x's 64 MiB parts, up to ~96 MiB on v5e/v6e's 128 MiB parts).
    needed = (2 * tm * D * x_itemsize + 2 * tm * Cp * o_itemsize
              + 2 * D * Cp * w_t.dtype.itemsize + 2 * 8 * Cp * 4)
    hard_cap = max(int(vmem_cap * 3 // 4), 32 << 20)
    vmem_limit = min(max(int(needed * 3 // 2) + (1 << 20), 32 << 20), hard_cap)

    run = functools.partial(_run_pallas, hidden_states, w_t, b2d, tm=tm,
                            compute_dtype=compute_dtype, vmem_limit=vmem_limit)
    try:
        out = run(single_buffer_resident=True)
    except Exception:
        # pl.Buffered(1) not supported by this JAX build; fall back to the
        # default double-buffered resident operands (same numerics).
        out = run(single_buffer_resident=False)

    return out[:, :C]


if __name__ == "__main__":
    key = jax.random.PRNGKey(0)
    kx, kw, kb, k2 = jax.random.split(key, 4)

    # Module config: input_dim=32, num_classes=8, pooler_dropout=0.1
    # (dropout is identity at inference time).
    N, input_dim, num_classes = 16, 32, 8
    x = jax.random.normal(kx, (N, input_dim), dtype=jnp.float32)
    weight = jax.random.normal(kw, (num_classes, input_dim), dtype=jnp.float32) * 0.02
    bias = jax.random.normal(kb, (num_classes,), dtype=jnp.float32) * 0.02

    # Weight/bias transform done once, at "model init" (hoisted out of forward).
    params = prepare_bart_classification_head_params(weight, bias)
    ref = x @ weight.T + bias

    # Tiny shape: takes the XLA fast path (Pallas launch would be pure overhead).
    out = jax.block_until_ready(bart_classification_head(x, params))
    assert out.shape == (N, num_classes)
    assert jnp.allclose(out, ref, atol=1e-5, rtol=1e-5)

    # Moderate ragged-N shape forced through the Pallas path: 2 row tiles
    # (grid >= 2), partial tail block, native-f32 compute (exact).
    N2, D2, C2 = 300, 96, 10
    kx2, kw2, kb2 = jax.random.split(k2, 3)
    x2 = jax.random.normal(kx2, (N2, D2), dtype=jnp.float32)
    w2 = jax.random.normal(kw2, (C2, D2), dtype=jnp.float32) * 0.02
    b2 = jax.random.normal(kb2, (C2,), dtype=jnp.float32) * 0.02
    params2 = prepare_bart_classification_head_params(w2, b2)
    ref2 = x2 @ w2.T + b2
    out2 = jax.block_until_ready(
        bart_classification_head(x2, params2, allow_xla_fallback=False))
    assert out2.shape == (N2, C2)
    assert jnp.allclose(out2, ref2, atol=1e-4, rtol=1e-4)

    # Opt-in bf16 compute path: weight prepared in bf16 once, x cast in-kernel.
    params2_bf16 = prepare_bart_classification_head_params(
        w2, b2, compute_dtype=jnp.bfloat16)
    out2_bf16 = jax.block_until_ready(
        bart_classification_head(x2, params2_bf16, allow_xla_fallback=False))
    assert out2_bf16.shape == (N2, C2)
    assert jnp.allclose(out2_bf16, ref2, atol=3e-2, rtol=3e-2)

    print("KERNEL_OK")
</pallas_src>

<mosaic_0001>
module attributes {stable_mosaic.version = 11 : i64} {
  func.func @_cls_head_kernel(%arg0: i32, %arg1: memref<256x96xf32, #tpu.memory_space<vmem>>, %arg2: memref<96x128xf32, #tpu.memory_space<vmem>>, %arg3: memref<1x128xf32, #tpu.memory_space<vmem>>, %arg4: memref<256x128xf32, #tpu.memory_space<vmem>>) attributes {dimension_semantics = [#tpu.dimension_semantics<parallel>], iteration_bounds = array<i64: 2>, scalar_prefetch = 0 : i64, scratch_operands = 0 : i64, tpu.core_type = #tpu.core_type<tc>, window_params = [{transform_indices = @transform_0, window_bounds = array<i64: 256, 96>}, {pipeline_mode = #tpu.pipeline_mode<synchronous>, transform_indices = @transform_1, window_bounds = array<i64: 96, 128>}, {pipeline_mode = #tpu.pipeline_mode<synchronous>, transform_indices = @transform_2, window_bounds = array<i64: 1, 128>}, {transform_indices = @transform_3, window_bounds = array<i64: 256, 128>}]} {
    %c0 = arith.constant 0 : index
    %c0_0 = arith.constant 0 : index
    %0 = vector.load %arg1[%c0, %c0_0] : memref<256x96xf32, #tpu.memory_space<vmem>>, vector<256x96xf32>
    %c0_1 = arith.constant 0 : index
    %c0_2 = arith.constant 0 : index
    %1 = vector.load %arg2[%c0_1, %c0_2] : memref<96x128xf32, #tpu.memory_space<vmem>>, vector<96x128xf32>
    %cst = arith.constant dense<0.000000e+00> : vector<256x128xf32>
    %2 = tpu.matmul %0, %1, %cst {dimension_numbers = #tpu.dot_dimension_numbers<[1], [0], [0], [1], [0, 0, 1, 1], [], []>} : vector<256x96xf32>, vector<96x128xf32>, vector<256x128xf32> -> vector<256x128xf32>
    %c0_3 = arith.constant 0 : index
    %c0_4 = arith.constant 0 : index
    %3 = vector.load %arg3[%c0_3, %c0_4] : memref<1x128xf32, #tpu.memory_space<vmem>>, vector<1x128xf32>
    %4 = vector.broadcast %3 : vector<1x128xf32> to vector<256x128xf32>
    %5 = arith.addf %2, %4 : vector<256x128xf32>
    %c0_5 = arith.constant 0 : index
    %c0_6 = arith.constant 0 : index
    %6 = vector.load %arg4[%c0_5, %c0_6] : memref<256x128xf32, #tpu.memory_space<vmem>>, vector<256x128xf32>
    tpu.vector_store %arg4[%c0_5, %c0_6], %5 {strides = array<i32>} : memref<256x128xf32, #tpu.memory_space<vmem>>, vector<256x128xf32>,
    return
  }
  func.func @transform_0(%arg0: i32) -> (i32, i32) {
    %c0_i32 = arith.constant 0 : i32
    %c0_i32_0 = arith.constant 0 : i32
    return %arg0, %c0_i32 : i32, i32
  }
  func.func @transform_1(%arg0: i32) -> (i32, i32) {
    %c0_i32 = arith.constant 0 : i32
    %c0_i32_0 = arith.constant 0 : i32
    %c0_i32_1 = arith.constant 0 : i32
    return %c0_i32, %c0_i32_0 : i32, i32
  }
  func.func @transform_2(%arg0: i32) -> (i32, i32) {
    %c0_i32 = arith.constant 0 : i32
    %c0_i32_0 = arith.constant 0 : i32
    %c0_i32_1 = arith.constant 0 : i32
    return %c0_i32, %c0_i32_0 : i32, i32
  }
  func.func @transform_3(%arg0: i32) -> (i32, i32) {
    %c0_i32 = arith.constant 0 : i32
    %c0_i32_0 = arith.constant 0 : i32
    return %arg0, %c0_i32 : i32, i32
  }
}

module attributes {stable_mosaic.version = 11 : i64} {
  func.func @_cls_head_kernel(%arg0: i32, %arg1: memref<256x96xf32, #tpu.memory_space<vmem>>, %arg2: memref<96x128xf32, #tpu.memory_space<vmem>>, %arg3: memref<1x128xf32, #tpu.memory_space<vmem>>, %arg4: memref<256x128xf32, #tpu.memory_space<vmem>>) attributes {dimension_semantics = [#tpu.dimension_semantics<parallel>], iteration_bounds = array<i64: 2>, scalar_prefetch = 0 : i64, scratch_operands = 0 : i64, tpu.core_type = #tpu.core_type<tc>, window_params = [{transform_indices = @transform_0, window_bounds = array<i64: 256, 96>}, {pipeline_mode = #tpu.pipeline_mode<synchronous>, transform_indices = @transform_1, window_bounds = array<i64: 96, 128>}, {pipeline_mode = #tpu.pipeline_mode<synchronous>, transform_indices = @transform_2, window_bounds = array<i64: 1, 128>}, {transform_indices = @transform_3, window_bounds = array<i64: 256, 128>}]} {
    %c0 = arith.constant 0 : index
    %c0_0 = arith.constant 0 : index
    %0 = vector.load %arg1[%c0, %c0_0] : memref<256x96xf32, #tpu.memory_space<vmem>>, vector<256x96xf32>
    %c0_1 = arith.constant 0 : index
    %c0_2 = arith.constant 0 : index
    %1 = vector.load %arg2[%c0_1, %c0_2] : memref<96x128xf32, #tpu.memory_space<vmem>>, vector<96x128xf32>
    %cst = arith.constant dense<0.000000e+00> : vector<256x128xf32>
    %2 = tpu.matmul %0, %1, %cst {dimension_numbers = #tpu.dot_dimension_numbers<[1], [0], [0], [1], [0, 0, 1, 1], [], []>} : vector<256x96xf32>, vector<96x128xf32>, vector<256x128xf32> -> vector<256x128xf32>
    %c0_3 = arith.constant 0 : index
    %c0_4 = arith.constant 0 : index
    %3 = vector.load %arg3[%c0_3, %c0_4] : memref<1x128xf32, #tpu.memory_space<vmem>>, vector<1x128xf32>
    %4 = vector.broadcast %3 : vector<1x128xf32> to vector<256x128xf32>
    %5 = arith.addf %2, %4 : vector<256x128xf32>
    %c0_5 = arith.constant 0 : index
    %c0_6 = arith.constant 0 : index
    %6 = vector.load %arg4[%c0_5, %c0_6] : memref<256x128xf32, #tpu.memory_space<vmem>>, vector<256x128xf32>
    tpu.vector_store %arg4[%c0_5, %c0_6], %5 {strides = array<i32>} : memref<256x128xf32, #tpu.memory_space<vmem>>, vector<256x128xf32>,
    return
  }
  func.func @transform_0(%arg0: i32) -> (i32, i32) {
    %c0_i32 = arith.constant 0 : i32
    %c0_i32_0 = arith.constant 0 : i32
    return %arg0, %c0_i32 : i32, i32
  }
  func.func @transform_1(%arg0: i32) -> (i32, i32) {
    %c0_i32 = arith.constant 0 : i32
    %c0_i32_0 = arith.constant 0 : i32
    %c0_i32_1 = arith.constant 0 : i32
    return %c0_i32, %c0_i32_0 : i32, i32
  }
  func.func @transform_2(%arg0: i32) -> (i32, i32) {
    %c0_i32 = arith.constant 0 : i32
    %c0_i32_0 = arith.constant 0 : i32
    %c0_i32_1 = arith.constant 0 : i32
    return %c0_i32, %c0_i32_0 : i32, i32
  }
  func.func @transform_3(%arg0: i32) -> (i32, i32) {
    %c0_i32 = arith.constant 0 : i32
    %c0_i32_0 = arith.constant 0 : i32
    return %arg0, %c0_i32 : i32, i32
  }
}

</mosaic_0001>

<llo_original>
// kernel: tpu_custom_call.1
$region0: #{tpu_custom_call.1}
  #allocation0 [shape = 'u32[]', space=smem, size = 0x4, offset = 0x4, fixed_abs, tag = 'smem constant byte address 0x4 - core index']
  #allocation1 [shape = 'u32[144,128]{1,0:T(1,128)}', space=vmem, size = 0x12000, scoped, tag = 'internal scratch']
  %s0 = inlined_call_operand.vmem [shape: f32[300,96], index: 0, kind: input, shape index: {}]
  %s1 = inlined_call_operand.vmem [shape: f32[96,128], index: 1, kind: input, shape index: {}]
  %s2 = inlined_call_operand.vmem [shape: f32[1,128], index: 2, kind: input, shape index: {}]
  %s3 = inlined_call_operand.hbm [shape: f32[300,128], index: 3, kind: output, shape index: {}]
  %s4 = sld [smem:[#allocation0]]
  $region45: #{tpu_custom_call.1} parent=0
    _
  %s6 = ssub.s32 1, %s4
  %s7 = scalar_select 0, %s6, %s4
  $region1: #{tpu_custom_call.1} parent=0
    #allocation2 [shape = 'u8[262144]{0}', space=vmem, size = 0x40000, scoped, tag = 'output window, operand 0']
    #allocation3 [shape = 's32[2]{0}', space=sflag, size = 0x8, scoped, tag = 'scoped memory for tpu_custom_call.1']
    %8 = vsyncpa [#allocation3], 0
    %s9 = scalar_lea.sflag [#allocation3], 1
    %10 = vsyncpa %s9, 0
    loop: start=0, step=1, limit=4
    $region2: #{tpu_custom_call.1} parent=1 // loop_pre_header
      _
    $region3: #{tpu_custom_call.1} parent=1 // loop_header
      %s12 = sphi 0, %s16
      %p13 = scmp.ge.s32.totalorder %s12, 4
      %s22 = sphi 0, %s24
      %s25 = sphi 0, %s22
      %s26 = sphi 0, %s25
      %s42 = sphi 0, %s26
      %s46 = sphi 0, %s46
      %s48 = sphi 0, %s46
      %s49 = sphi 0, %s48
      %s63 = sphi 0, %s49
      %s67 = sphi 0, %s67
      %s69 = sphi 0, %s67
      %s70 = sphi 0, %s69
      %s84 = sphi 0, %s70
      %s90 = sphi 0, %s92
      %s93 = sphi 0, %s90
      %s94 = sphi 0, %s93
      %s110 = sphi 0, %s94
    $region4: #{tpu_custom_call.1} parent=1 // loop_header_branch
      %15 = sbr.rel (%p13) target = $region8
    $region5: #{tpu_custom_call.1} parent=1 // loop_body
      %s17 = ssub.s32 %s12, 1
      %s18 = ssub.s32 %s12, 2
      %s19 = sadd.s32 %s12, 1
      %s20 = ssub.s32 %s12, %s19
      %p21 = scmp.eq.s32.totalorder %s20, 0
      %s23 = sadd.s32 %s22, 1
      %s24 = scalar_select %p21, %s22, %s23
      %p27 = pneg %p21
      %p28 = scmp.eq.s32.totalorder %s12, 1
      %p29 = por %p27, %p28
      %p30 = scmp.ne.s32.totalorder %s22, %s25
      %p31 = scmp.eq.s32.totalorder %s12, 0
      %p32 = por %p30, %p31
      %p33 = scmp.ne.s32.totalorder %s22, %s25
      %p34 = scmp.eq.s32.totalorder %s17, 1
      %p35 = por %p33, %p34
      %p36 = scmp.ne.s32.totalorder %s25, %s26
      %p37 = scmp.eq.s32.totalorder %s17, 0
      %p38 = por %p36, %p37
      %p39 = scmp.ne.s32.totalorder %s25, %s26
      %p40 = scmp.eq.s32.totalorder %s18, 1
      %p41 = por %p39, %p40
      %p43 = scmp.ne.s32.totalorder %s26, %s42
      %p44 = scmp.eq.s32.totalorder %s18, 0
      %p45 = por %p43, %p44
      %s47 = sadd.s32 %s46, 1
      %p50 = scmp.eq.s32.totalorder %s12, 1
      %p51 = scmp.ne.s32.totalorder %s46, %s48
      %p52 = scmp.eq.s32.totalorder %s12, 0
      %p53 = por %p51, %p52
      %p54 = scmp.ne.s32.totalorder %s46, %s48
      %p55 = scmp.eq.s32.totalorder %s17, 1
      %p56 = por %p54, %p55
      %p57 = scmp.ne.s32.totalorder %s48, %s49
      %p58 = scmp.eq.s32.totalorder %s17, 0
      %p59 = por %p57, %p58
      %p60 = scmp.ne.s32.totalorder %s48, %s49
      %p61 = scmp.eq.s32.totalorder %s18, 1
      %p62 = por %p60, %p61
      %p64 = scmp.ne.s32.totalorder %s49, %s63
      %p65 = scmp.eq.s32.totalorder %s18, 0
      %p66 = por %p64, %p65
      %s68 = sadd.s32 %s67, 1
      %p71 = scmp.eq.s32.totalorder %s12, 1
      %p72 = scmp.ne.s32.totalorder %s67, %s69
      %p73 = scmp.eq.s32.totalorder %s12, 0
      %p74 = por %p72, %p73
      %p75 = scmp.ne.s32.totalorder %s67, %s69
      %p76 = scmp.eq.s32.totalorder %s17, 1
      %p77 = por %p75, %p76
      %p78 = scmp.ne.s32.totalorder %s69, %s70
      %p79 = scmp.eq.s32.totalorder %s17, 0
      %p80 = por %p78, %p79
      %p81 = scmp.ne.s32.totalorder %s69, %s70
      %p82 = scmp.eq.s32.totalorder %s18, 1
      %p83 = por %p81, %p82
      %p85 = scmp.ne.s32.totalorder %s70, %s84
      %p86 = scmp.eq.s32.totalorder %s18, 0
      %p87 = por %p85, %p86
      %s88 = ssub.s32 %s12, %s19
      %p89 = scmp.eq.s32.totalorder %s88, 0
      %s91 = sadd.s32 %s90, 1
      %s92 = scalar_select %p89, %s90, %s91
      %p95 = pneg %p89
      %p96 = scmp.eq.s32.totalorder %s12, 1
      %p97 = por %p95, %p96
      %p98 = scmp.ne.s32.totalorder %s90, %s93
      %p99 = scmp.eq.s32.totalorder %s12, 0
      %p100 = por %p98, %p99
      %p101 = scmp.ne.s32.totalorder %s90, %s93
      %p102 = scmp.eq.s32.totalorder %s17, 1
      %p103 = por %p101, %p102
      %p104 = scmp.ne.s32.totalorder %s93, %s94
      %p105 = scmp.eq.s32.totalorder %s17, 0
      %p106 = por %p104, %p105
      %p107 = scmp.ne.s32.totalorder %s93, %s94
      %p108 = scmp.eq.s32.totalorder %s18, 1
      %p109 = por %p107, %p108
      %p111 = scmp.ne.s32.totalorder %s94, %s110
      %p112 = scmp.eq.s32.totalorder %s18, 0
      %p113 = por %p111, %p112
      %p114 = scmp.le.s32.totalorder 1, %s12
      %p115 = scmp.lt.s32.totalorder %s12, 3
      %p116 = pnand %p114, %p115
      %p117 = pneg %p116
      // Predicated region
      $region9: #{tpu_custom_call.1} parent=5 // pred_check
        _
      $region10: #{tpu_custom_call.1} parent=5 // pred_check_branch
        %119 = sbr.rel (%p116) target = $region12
      $region11: #{tpu_custom_call.1} parent=5 // pred_region
        %s120 = ssub.s32 %s12, 1
        // Predicated region
        $region13: #{tpu_custom_call.1} parent=11 // pred_check
          %p121 = pneg %p59
        $region14: #{tpu_custom_call.1} parent=11 // pred_check_branch
          %123 = sbr.rel (%p121) target = $region16
        $region15: #{tpu_custom_call.1} parent=11 // pred_region
          _
        $region16: #{tpu_custom_call.1} parent=11 // pred_fallthru
          _
        // Predicated region
        $region17: #{tpu_custom_call.1} parent=11 // pred_check
          %p124 = pneg %p80
        $region18: #{tpu_custom_call.1} parent=11 // pred_check_branch
          %126 = sbr.rel (%p124) target = $region20
        $region19: #{tpu_custom_call.1} parent=11 // pred_region
          _
        $region20: #{tpu_custom_call.1} parent=11 // pred_fallthru
          _
      $region12: #{tpu_custom_call.1} parent=5 // pred_fallthru
        _
      %p127 = scmp.lt.s32.totalorder %s12, 2
      // Predicated region
      $region21: #{tpu_custom_call.1} parent=5 // pred_check
        %p128 = pneg %p127
      $region22: #{tpu_custom_call.1} parent=5 // pred_check_branch
        %130 = sbr.rel (%p128) target = $region24
      $region23: #{tpu_custom_call.1} parent=5 // pred_region
        // Predicated region
        $region25: #{tpu_custom_call.1} parent=23 // pred_check
          %p131 = pneg %p32
        $region26: #{tpu_custom_call.1} parent=23 // pred_check_branch
          %133 = sbr.rel (%p131) target = $region28
        $region27: #{tpu_custom_call.1} parent=23 // pred_region
          %s134 = smul.u32 32, %s12
          %s135 = ssub.s32 38, %s134
          %p136 = scmp.lt.s32.totalorder %s135, 32
          %s137 = scalar_select %p136, %s135, 32
          %s138 = smul.u32 128, %s137
          %p139 = scmp.lt.s32.totalorder %s134, 37
          %s140 = scalar_select %p139, %s134, 37
          %s141 = smul.addr %s140, 8
          %s142 = scalar_lea.vmem %s0, %s141
          %s143 = smul.u32 32, %s12
          %s144 = ssub.s32 38, %s143
          %p145 = scmp.lt.s32.totalorder %s144, 32
          %s146 = scalar_select %p145, %s144, 32
          %s147 = smul.u32 128, %s146
        $region28: #{tpu_custom_call.1} parent=23 // pred_fallthru
          _
      $region24: #{tpu_custom_call.1} parent=5 // pred_fallthru
        _
      %p148 = scmp.le.s32.totalorder 1, %s12
      %p149 = scmp.lt.s32.totalorder %s12, 3
      %p150 = pnand %p148, %p149
      %p151 = pneg %p150
      // Predicated region
      $region29: #{tpu_custom_call.1} parent=5 // pred_check
        _
      $region30: #{tpu_custom_call.1} parent=5 // pred_check_branch
        %153 = sbr.rel (%p150) target = $region32
      $region31: #{tpu_custom_call.1} parent=5 // pred_region
        %s154 = ssub.s32 %s12, 1
        %s155 = smul.u32 32, %s17
        %s156 = ssub.s32 38, %s155
        %p157 = scmp.lt.s32.totalorder %s156, 32
        %s158 = scalar_select %p157, %s156, 32
        %s159 = smul.u32 128, %s158
        %p160 = scmp.lt.s32.totalorder %s155, 37
        %s161 = scalar_select %p160, %s155, 37
        %s162 = smul.addr %s161, 8
        %s163 = scalar_lea.vmem %s0, %s162
        %p164 = pneg %p38
        %p165 = pneg %p35
        %p166 = pneg %p59
        %p167 = pneg %p56
        %p168 = pneg %p80
        %p169 = pneg %p77
        %p170 = pneg %p106
        %p171 = pneg %p103
        %s172 = sand.u32 %s93, 1
        %s173 = scalar_lea.sflag [#allocation3], %s172
        %s174 = sand.u32 %s93, 1
        %s175 = smul.addr %s174, 256
        %s176 = scalar_lea.vmem [#allocation2], %s175
        %s177 = smul.u32 32, %s17
        %s178 = ssub.s32 38, %s177
        %p179 = scmp.lt.s32.totalorder %s178, 32
        %s180 = scalar_select %p179, %s178, 32
        %s181 = smul.u32 128, %s180
        %p182 = scmp.lt.s32.totalorder %s177, 37
        %s183 = scalar_select %p182, %s177, 37
        %s184 = smul.addr %s183, 8
        %s185 = scalar_lea.vmem %s0, %s184
        %s186 = smul.u32 32, %s17
        %s187 = ssub.s32 38, %s186
        %p188 = scmp.lt.s32.totalorder %s187, 32
        %s189 = scalar_select %p188, %s187, 32
        %s190 = smul.u32 128, %s189
        %s191 = smul.u32 32, %s17
        %s192 = ssub.s32 38, %s191
        %p193 = scmp.lt.s32.totalorder %s192, 32
        %s194 = scalar_select %p193, %s192, 32
        %s195 = smul.u32 128, %s194
        %v196 = vld [vmem:[%s185] sm:$0xff]
        %v197 = vld [vmem:[%s185 + $0x8] sm:$0xff]
        %v198 = vld [vmem:[%s185 + $0x10] sm:$0xff]
        %v199 = vld [vmem:[%s185 + $0x18] sm:$0xff]
        %v200 = vld [vmem:[%s185 + $0x20] sm:$0xff]
        %v201 = vld [vmem:[%s185 + $0x28] sm:$0xff]
        %v202 = vld [vmem:[%s185 + $0x30] sm:$0xff]
        %v203 = vld [vmem:[%s185 + $0x38] sm:$0xff]
        %v204 = vld [vmem:[%s185 + $0x40] sm:$0xff]
        %v205 = vld [vmem:[%s185 + $0x48] sm:$0xff]
        %v206 = vld [vmem:[%s185 + $0x50] sm:$0xff]
        %v207 = vld [vmem:[%s185 + $0x58] sm:$0xff]
        %v208 = vld [vmem:[%s185 + $0x60] sm:$0xff]
        %v209 = vld [vmem:[%s185 + $0x68] sm:$0xff]
        %v210 = vld [vmem:[%s185 + $0x70] sm:$0xff]
        %v211 = vld [vmem:[%s185 + $0x78] sm:$0xff]
        %v212 = vld [vmem:[%s185 + $0x80] sm:$0xff]
        %v213 = vld [vmem:[%s185 + $0x88] sm:$0xff]
        %v214 = vld [vmem:[%s185 + $0x90] sm:$0xff]
        %v215 = vld [vmem:[%s185 + $0x98] sm:$0xff]
        %v216 = vld [vmem:[%s185 + $0xa0] sm:$0xff]
        %v217 = vld [vmem:[%s185 + $0xa8] sm:$0xff]
        %v218 = vld [vmem:[%s185 + $0xb0] sm:$0xff]
        %v219 = vld [vmem:[%s185 + $0xb8] sm:$0xff]
        %v220 = vld [vmem:[%s185 + $0xc0] sm:$0xff]
        %v221 = vld [vmem:[%s185 + $0xc8] sm:$0xff]
        %v222 = vld [vmem:[%s185 + $0xd0] sm:$0xff]
        %v223 = vld [vmem:[%s185 + $0xd8] sm:$0xff]
        %v224 = vld [vmem:[%s185 + $0xe0] sm:$0xff]
        %v225 = vld [vmem:[%s185 + $0xe8] sm:$0xff]
        %v226 = vld [vmem:[%s185 + $0xf0] sm:$0xff]
        %v227 = vld [vmem:[%s185 + $0xf8] sm:$0xff]
        %v228 = vld [vmem:[%s1] sm:$0xff]
        %v229 = vld [vmem:[%s1 + $0x8] sm:$0xff]
        %v230 = vld [vmem:[%s1 + $0x10] sm:$0xff]
        %v231 = vld [vmem:[%s1 + $0x18] sm:$0xff]
        %v232 = vld [vmem:[%s1 + $0x20] sm:$0xff]
        %v233 = vld [vmem:[%s1 + $0x28] sm:$0xff]
        %v234 = vld [vmem:[%s1 + $0x30] sm:$0xff]
        %v235 = vld [vmem:[%s1 + $0x38] sm:$0xff]
        %v236 = vld [vmem:[%s1 + $0x40] sm:$0xff]
        %v237 = vld [vmem:[%s1 + $0x48] sm:$0xff]
        %v238 = vld [vmem:[%s1 + $0x50] sm:$0xff]
        %v239 = vld [vmem:[%s1 + $0x58] sm:$0xff]
        %v240 = vld [vmem:[%s2] sm:$0x1]
        %v242 = vlaneseq
        %v243 = vshrl.u32 %v242, 7
        %v244 = vsub.s32 0, %v243
        %v245 = vrot.slane %v240, %v244
        %vm247 = vcmask 785408
        %v249 = vsel %vm247, %v196, 0
        %v252 = vsel %vm247, %v197, 0
        %v255 = vsel %vm247, %v198, 0
        %v258 = vsel %vm247, %v199, 0
        %v261 = vsel %vm247, %v200, 0
        %v264 = vsel %vm247, %v201, 0
        %v267 = vsel %vm247, %v202, 0
        %v270 = vsel %vm247, %v203, 0
        %v273 = vsel %vm247, %v204, 0
        %v276 = vsel %vm247, %v205, 0
        %v279 = vsel %vm247, %v206, 0
        %v282 = vsel %vm247, %v207, 0
        %v285 = vsel %vm247, %v208, 0
        %v288 = vsel %vm247, %v209, 0
        %v291 = vsel %vm247, %v210, 0
        %v294 = vsel %vm247, %v211, 0
        %v297 = vsel %vm247, %v212, 0
        %v300 = vsel %vm247, %v213, 0
        %v303 = vsel %vm247, %v214, 0
        %v306 = vsel %vm247, %v215, 0
        %v309 = vsel %vm247, %v216, 0
        %v312 = vsel %vm247, %v217, 0
        %v315 = vsel %vm247, %v218, 0
        %v318 = vsel %vm247, %v219, 0
        %v321 = vsel %vm247, %v220, 0
        %v324 = vsel %vm247, %v221, 0
        %v327 = vsel %vm247, %v222, 0
        %v330 = vsel %vm247, %v223, 0
        %v333 = vsel %vm247, %v224, 0
        %v336 = vsel %vm247, %v225, 0
        %v339 = vsel %vm247, %v226, 0
        %v342 = vsel %vm247, %v227, 0
        %344 = vmatprep.subr.mxu0 0.0
        %345 = vmatpush1.msra.mxu0 %v228
        %346 = vmatprep.subr.mxu0 0.0
        %347 = vmatpush1.msra.mxu0 %v229
        %348 = vmatprep.subr.mxu0 0.0
        %349 = vmatpush1.msra.mxu0 %v230
        %350 = vmatprep.subr.mxu0 0.0
        %351 = vmatpush1.msra.mxu0 %v231
        %352 = vmatprep.subr.mxu0 0.0
        %353 = vmatpush1.msra.mxu0 %v232
        %354 = vmatprep.subr.mxu0 0.0
        %355 = vmatpush1.msra.mxu0 %v233
        %356 = vmatprep.subr.mxu0 0.0
        %357 = vmatpush1.msra.mxu0 %v234
        %358 = vmatprep.subr.mxu0 0.0
        %359 = vmatpush1.msra.mxu0 %v235
        %360 = vmatprep.subr.mxu0 0.0
        %361 = vmatpush1.msra.mxu0 %v236
        %362 = vmatprep.subr.mxu0 0.0
        %363 = vmatpush1.msra.mxu0 %v237
        %364 = vmatprep.subr.mxu0 0.0
        %365 = vmatpush1.msra.mxu0 %v238
        %366 = vmatprep.subr.mxu0 0.0
        %367 = vmatpush1.msra.mxu0 %v239
        %368 = vmatprep.subr.mxu0 0.0
        %369 = vmatpush1.msra.mxu0 0.0
        %370 = vmatprep.subr.mxu0 0.0
        %371 = vmatpush1.msra.mxu0 0.0
        %372 = vmatprep.subr.mxu0 0.0
        %373 = vmatpush1.msra.mxu0 0.0
        %374 = vmatprep.subr.mxu0 0.0
        %375 = vmatpush1.msra.mxu0 0.0
        %376 = vmatprep.subr.mxu0 0.0
        %377 = vmatpush1.msra.mxu0 0.0
        %378 = vmatprep.subr.mxu0 0.0
        %379 = vmatpush1.msra.mxu0 0.0
        %380 = vmatprep.subr.mxu0 0.0
        %381 = vmatpush1.msra.mxu0 0.0
        %382 = vmatprep.subr.mxu0 0.0
        %383 = vmatpush1.msra.mxu0 0.0
        %384 = vmatprep.subr.mxu0 0.0
        %385 = vmatpush1.msra.mxu0 0.0
        %386 = vmatprep.subr.mxu0 0.0
        %387 = vmatpush1.msra.mxu0 0.0
        %388 = vmatprep.subr.mxu0 0.0
        %389 = vmatpush1.msra.mxu0 0.0
        %390 = vmatprep.subr.mxu0 0.0
        %391 = vmatpush1.msra.mxu0 0.0
        %392 = vmatprep.subr.mxu0 0.0
        %393 = vmatpush1.msra.mxu0 0.0
        %394 = vmatprep.subr.mxu0 0.0
        %395 = vmatpush1.msra.mxu0 0.0
        %396 = vmatprep.subr.mxu0 0.0
        %397 = vmatpush1.msra.mxu0 0.0
        %398 = vmatprep.subr.mxu0 0.0
        %399 = vmatpush1.msra.mxu0 0.0
        %400 = vmatprep.subr.mxu0 0.0
        %401 = vmatpush1.msra.mxu0 0.0
        %402 = vmatprep.subr.mxu0 0.0
        %403 = vmatpush1.msra.mxu0 0.0
        %404 = vmatprep.subr.mxu0 0.0
        %405 = vmatpush1.msra.mxu0 0.0
        %406 = vmatprep.subr.mxu0 0.0
        %407 = vmatpush1.msra.mxu0 0.0
        %408 = vmatprep.mubr.f32.mxu0 0.0
        %409 = vmatmul.mubr.f32.gmra.mrb[0].mxu0 %v249
        %v410 = vpop.f32.mrb[0].mxu0
        %v411 = vadd.f32 %v245, %v410
        %v412 = vpop.f32.mrb[0].mxu0
        %413 = vmatprep.mubr.f32.mxu0 0.0
        %414 = vmatmul.mubr.f32.gmra.mrb[0].mxu0 %v252
        %v415 = vpop.f32.mrb[0].mxu0
        %v416 = vadd.f32 %v245, %v415
        %v417 = vpop.f32.mrb[0].mxu0
        %418 = vmatprep.mubr.f32.mxu0 0.0
        %419 = vmatmul.mubr.f32.gmra.mrb[0].mxu0 %v255
        %v420 = vpop.f32.mrb[0].mxu0
        %v421 = vadd.f32 %v245, %v420
        %v422 = vpop.f32.mrb[0].mxu0
        %423 = vmatprep.mubr.f32.mxu0 0.0
        %424 = vmatmul.mubr.f32.gmra.mrb[0].mxu0 %v258
        %v425 = vpop.f32.mrb[0].mxu0
        %v426 = vadd.f32 %v245, %v425
        %v427 = vpop.f32.mrb[0].mxu0
        %428 = vmatprep.mubr.f32.mxu0 0.0
        %429 = vmatmul.mubr.f32.gmra.mrb[0].mxu0 %v261
        %v430 = vpop.f32.mrb[0].mxu0
        %v431 = vadd.f32 %v245, %v430
        %v432 = vpop.f32.mrb[0].mxu0
        %433 = vmatprep.mubr.f32.mxu0 0.0
        %434 = vmatmul.mubr.f32.gmra.mrb[0].mxu0 %v264
        %v435 = vpop.f32.mrb[0].mxu0
        %v436 = vadd.f32 %v245, %v435
        %v437 = vpop.f32.mrb[0].mxu0
        %438 = vmatprep.mubr.f32.mxu0 0.0
        %439 = vmatmul.mubr.f32.gmra.mrb[0].mxu0 %v267
        %v440 = vpop.f32.mrb[0].mxu0
        %v441 = vadd.f32 %v245, %v440
        %v442 = vpop.f32.mrb[0].mxu0
        %443 = vmatprep.mubr.f32.mxu0 0.0
        %444 = vmatmul.mubr.f32.gmra.mrb[0].mxu0 %v270
        %v445 = vpop.f32.mrb[0].mxu0
        %v446 = vadd.f32 %v245, %v445
        %v447 = vpop.f32.mrb[0].mxu0
        %448 = vmatprep.mubr.f32.mxu0 0.0
        %449 = vmatmul.mubr.f32.gmra.mrb[0].mxu0 %v273
        %v450 = vpop.f32.mrb[0].mxu0
        %v451 = vadd.f32 %v245, %v450
        %v452 = vpop.f32.mrb[0].mxu0
        %453 = vmatprep.mubr.f32.mxu0 0.0
        %454 = vmatmul.mubr.f32.gmra.mrb[0].mxu0 %v276
        %v455 = vpop.f32.mrb[0].mxu0
        %v456 = vadd.f32 %v245, %v455
        %v457 = vpop.f32.mrb[0].mxu0
        %458 = vmatprep.mubr.f32.mxu0 0.0
        %459 = vmatmul.mubr.f32.gmra.mrb[0].mxu0 %v279
        %v460 = vpop.f32.mrb[0].mxu0
        %v461 = vadd.f32 %v245, %v460
        %v462 = vpop.f32.mrb[0].mxu0
        %463 = vmatprep.mubr.f32.mxu0 0.0
        %464 = vmatmul.mubr.f32.gmra.mrb[0].mxu0 %v282
        %v465 = vpop.f32.mrb[0].mxu0
        %v466 = vadd.f32 %v245, %v465
        %v467 = vpop.f32.mrb[0].mxu0
        %468 = vmatprep.mubr.f32.mxu0 0.0
        %469 = vmatmul.mubr.f32.gmra.mrb[0].mxu0 %v285
        %v470 = vpop.f32.mrb[0].mxu0
        %v471 = vadd.f32 %v245, %v470
        %v472 = vpop.f32.mrb[0].mxu0
        %473 = vmatprep.mubr.f32.mxu0 0.0
        %474 = vmatmul.mubr.f32.gmra.mrb[0].mxu0 %v288
        %v475 = vpop.f32.mrb[0].mxu0
        %v476 = vadd.f32 %v245, %v475
        %v477 = vpop.f32.mrb[0].mxu0
        %478 = vmatprep.mubr.f32.mxu0 0.0
        %479 = vmatmul.mubr.f32.gmra.mrb[0].mxu0 %v291
        %v480 = vpop.f32.mrb[0].mxu0
        %v481 = vadd.f32 %v245, %v480
        %v482 = vpop.f32.mrb[0].mxu0
        %483 = vmatprep.mubr.f32.mxu0 0.0
        %484 = vmatmul.mubr.f32.gmra.mrb[0].mxu0 %v294
        %v485 = vpop.f32.mrb[0].mxu0
        %v486 = vadd.f32 %v245, %v485
        %v487 = vpop.f32.mrb[0].mxu0
        %488 = vmatprep.mubr.f32.mxu0 0.0
        %489 = vmatmul.mubr.f32.gmra.mrb[0].mxu0 %v297
        %v490 = vpop.f32.mrb[0].mxu0
        %v491 = vadd.f32 %v245, %v490
        %v492 = vpop.f32.mrb[0].mxu0
        %493 = vmatprep.mubr.f32.mxu0 0.0
        %494 = vmatmul.mubr.f32.gmra.mrb[0].mxu0 %v300
        %v495 = vpop.f32.mrb[0].mxu0
        %v496 = vadd.f32 %v245, %v495
        %v497 = vpop.f32.mrb[0].mxu0
        %498 = vmatprep.mubr.f32.mxu0 0.0
        %499 = vmatmul.mubr.f32.gmra.mrb[0].mxu0 %v303
        %v500 = vpop.f32.mrb[0].mxu0
        %v501 = vadd.f32 %v245, %v500
        %v502 = vpop.f32.mrb[0].mxu0
        %503 = vmatprep.mubr.f32.mxu0 0.0
        %504 = vmatmul.mubr.f32.gmra.mrb[0].mxu0 %v306
        %v505 = vpop.f32.mrb[0].mxu0
        %v506 = vadd.f32 %v245, %v505
        %v507 = vpop.f32.mrb[0].mxu0
        %508 = vmatprep.mubr.f32.mxu0 0.0
        %509 = vmatmul.mubr.f32.gmra.mrb[0].mxu0 %v309
        %v510 = vpop.f32.mrb[0].mxu0
        %v511 = vadd.f32 %v245, %v510
        %v512 = vpop.f32.mrb[0].mxu0
        %513 = vmatprep.mubr.f32.mxu0 0.0
        %514 = vmatmul.mubr.f32.gmra.mrb[0].mxu0 %v312
        %v515 = vpop.f32.mrb[0].mxu0
        %v516 = vadd.f32 %v245, %v515
        %v517 = vpop.f32.mrb[0].mxu0
        %518 = vmatprep.mubr.f32.mxu0 0.0
        %519 = vmatmul.mubr.f32.gmra.mrb[0].mxu0 %v315
        %v520 = vpop.f32.mrb[0].mxu0
        %v521 = vadd.f32 %v245, %v520
        %v522 = vpop.f32.mrb[0].mxu0
        %523 = vmatprep.mubr.f32.mxu0 0.0
        %524 = vmatmul.mubr.f32.gmra.mrb[0].mxu0 %v318
        %v525 = vpop.f32.mrb[0].mxu0
        %v526 = vadd.f32 %v245, %v525
        %v527 = vpop.f32.mrb[0].mxu0
        %528 = vmatprep.mubr.f32.mxu0 0.0
        %529 = vmatmul.mubr.f32.gmra.mrb[0].mxu0 %v321
        %v530 = vpop.f32.mrb[0].mxu0
        %v531 = vadd.f32 %v245, %v530
        %v532 = vpop.f32.mrb[0].mxu0
        %533 = vmatprep.mubr.f32.mxu0 0.0
        %534 = vmatmul.mubr.f32.gmra.mrb[0].mxu0 %v324
        %v535 = vpop.f32.mrb[0].mxu0
        %v536 = vadd.f32 %v245, %v535
        %v537 = vpop.f32.mrb[0].mxu0
        %538 = vmatprep.mubr.f32.mxu0 0.0
        %539 = vmatmul.mubr.f32.gmra.mrb[0].mxu0 %v327
        %v540 = vpop.f32.mrb[0].mxu0
        %v541 = vadd.f32 %v245, %v540
        %v542 = vpop.f32.mrb[0].mxu0
        %543 = vmatprep.mubr.f32.mxu0 0.0
        %544 = vmatmul.mubr.f32.gmra.mrb[0].mxu0 %v330
        %v545 = vpop.f32.mrb[0].mxu0
        %v546 = vadd.f32 %v245, %v545
        %v547 = vpop.f32.mrb[0].mxu0
        %548 = vmatprep.mubr.f32.mxu0 0.0
        %549 = vmatmul.mubr.f32.gmra.mrb[0].mxu0 %v333
        %v550 = vpop.f32.mrb[0].mxu0
        %v551 = vadd.f32 %v245, %v550
        %v552 = vpop.f32.mrb[0].mxu0
        %553 = vmatprep.mubr.f32.mxu0 0.0
        %554 = vmatmul.mubr.f32.gmra.mrb[0].mxu0 %v336
        %v555 = vpop.f32.mrb[0].mxu0
        %v556 = vadd.f32 %v245, %v555
        %v557 = vpop.f32.mrb[0].mxu0
        %558 = vmatprep.mubr.f32.mxu0 0.0
        %559 = vmatmul.mubr.f32.gmra.mrb[0].mxu0 %v339
        %v560 = vpop.f32.mrb[0].mxu0
        %v561 = vadd.f32 %v245, %v560
        %v562 = vpop.f32.mrb[0].mxu0
        %563 = vmatprep.mubr.f32.mxu0 0.0
        %564 = vmatmul.mubr.f32.gmra.mrb[0].mxu0 %v342
        %v565 = vpop.f32.mrb[0].mxu0
        %v566 = vadd.f32 %v245, %v565
        %v567 = vpop.f32.mrb[0].mxu0
        %568 = vdwg.mxu0
        %569 = vst [vmem:[%s176] sm:$0xff] %v411
        %570 = vst [vmem:[%s176 + $0x8] sm:$0xff] %v416
        %571 = vst [vmem:[%s176 + $0x10] sm:$0xff] %v421
        %572 = vst [vmem:[%s176 + $0x18] sm:$0xff] %v426
        %573 = vst [vmem:[%s176 + $0x20] sm:$0xff] %v431
        %574 = vst [vmem:[%s176 + $0x28] sm:$0xff] %v436
        %575 = vst [vmem:[%s176 + $0x30] sm:$0xff] %v441
        %576 = vst [vmem:[%s176 + $0x38] sm:$0xff] %v446
        %577 = vst [vmem:[%s176 + $0x40] sm:$0xff] %v451
        %578 = vst [vmem:[%s176 + $0x48] sm:$0xff] %v456
        %579 = vst [vmem:[%s176 + $0x50] sm:$0xff] %v461
        %580 = vst [vmem:[%s176 + $0x58] sm:$0xff] %v466
        %581 = vst [vmem:[%s176 + $0x60] sm:$0xff] %v471
        %582 = vst [vmem:[%s176 + $0x68] sm:$0xff] %v476
        %583 = vst [vmem:[%s176 + $0x70] sm:$0xff] %v481
        %584 = vst [vmem:[%s176 + $0x78] sm:$0xff] %v486
        %585 = vst [vmem:[%s176 + $0x80] sm:$0xff] %v491
        %586 = vst [vmem:[%s176 + $0x88] sm:$0xff] %v496
        %587 = vst [vmem:[%s176 + $0x90] sm:$0xff] %v501
        %588 = vst [vmem:[%s176 + $0x98] sm:$0xff] %v506
        %589 = vst [vmem:[%s176 + $0xa0] sm:$0xff] %v511
        %590 = vst [vmem:[%s176 + $0xa8] sm:$0xff] %v516
        %591 = vst [vmem:[%s176 + $0xb0] sm:$0xff] %v521
        %592 = vst [vmem:[%s176 + $0xb8] sm:$0xff] %v526
        %593 = vst [vmem:[%s176 + $0xc0] sm:$0xff] %v531
        %594 = vst [vmem:[%s176 + $0xc8] sm:$0xff] %v536
        %595 = vst [vmem:[%s176 + $0xd0] sm:$0xff] %v541
        %596 = vst [vmem:[%s176 + $0xd8] sm:$0xff] %v546
        %597 = vst [vmem:[%s176 + $0xe0] sm:$0xff] %v551
        %598 = vst [vmem:[%s176 + $0xe8] sm:$0xff] %v556
        %599 = vst [vmem:[%s176 + $0xf0] sm:$0xff] %v561
        %600 = vst [vmem:[%s176 + $0xf8] sm:$0xff] %v566
        %s601 = sand.u32 %s93, 1
        %s602 = scalar_lea.sflag [#allocation3], %s601
        %s603 = sand.u32 %s93, 1
        %s604 = smul.addr %s603, 256
        %s605 = scalar_lea.vmem [#allocation2], %s604
        // Predicated region
        $region33: #{tpu_custom_call.1} parent=31 // pred_check
          %p606 = pneg %p103
        $region34: #{tpu_custom_call.1} parent=31 // pred_check_branch
          %608 = sbr.rel (%p606) target = $region36
        $region35: #{tpu_custom_call.1} parent=31 // pred_region
          %s609 = smul.u32 32, %s17
          %s610 = ssub.s32 38, %s609
          %p611 = scmp.lt.s32.totalorder %s610, 32
          %s612 = scalar_select %p611, %s610, 32
          %s613 = smul.u32 128, %s612
          %s615 = ssub.s32 4096, %s613
          %616 = vsyncadd %s602, %s615
          %p617 = scmp.ne.s32.totalorder 0, %s613
          %s618 = smul.addr %s609, 128
          %s619 = scalar_lea.hbm %s3, %s618
          %s620 = smul.u32 8, %s612
          %s621 = sshll.u32 %s605, 4
          %s622 = int_to_ptr.vmem [resolvable:$true] %s621
          %s623 = sshll.u32 %s620, 4
          %627 = dma.vmem_to_hbm [thread:$0]  (%p617), %s622, %s623, %s619, %s602, 128, 128, 8
        $region36: #{tpu_custom_call.1} parent=31 // pred_fallthru
          _
      $region32: #{tpu_custom_call.1} parent=5 // pred_fallthru
        _
      %p628 = scmp.le.s32.totalorder 2, %s12
      // Predicated region
      $region37: #{tpu_custom_call.1} parent=5 // pred_check
        %p629 = pneg %p628
      $region38: #{tpu_custom_call.1} parent=5 // pred_check_branch
        %631 = sbr.rel (%p629) target = $region40
      $region39: #{tpu_custom_call.1} parent=5 // pred_region
        %s632 = ssub.s32 %s12, 2
        // Predicated region
        $region41: #{tpu_custom_call.1} parent=39 // pred_check
          %p633 = pneg %p109
        $region42: #{tpu_custom_call.1} parent=39 // pred_check_branch
          %635 = sbr.rel (%p633) target = $region44
        $region43: #{tpu_custom_call.1} parent=39 // pred_region
          %s636 = sand.u32 %s94, 1
          %s637 = scalar_lea.sflag [#allocation3], %s636
          %s638 = sand.u32 %s94, 1
          %s639 = smul.addr %s638, 256
          %s640 = scalar_lea.vmem [#allocation2], %s639
          %641 = dma.done %s637, 4096
        $region44: #{tpu_custom_call.1} parent=39 // pred_fallthru
          _
      $region40: #{tpu_custom_call.1} parent=5 // pred_fallthru
        _
    $region6: #{tpu_custom_call.1} parent=1 // loop_footer
      %s16 = sadd.s32 1, %s12
    $region7: #{tpu_custom_call.1} parent=1 // loop_footer_branch
      %11 = sbr.rel target = $region3
    $region8: #{tpu_custom_call.1} parent=1 // loop_exit
      _
    %642 = vsyncpa [#allocation3], 1
    %s643 = scalar_lea.sflag [#allocation3], 1
    %644 = vsyncpa %s643, 1

// kernel: tpu_custom_call.1
$region0: #{tpu_custom_call.1}
  #allocation0 [shape = 'u32[]', space=smem, size = 0x4, offset = 0x4, fixed_abs, tag = 'smem constant byte address 0x4 - core index']
  #allocation1 [shape = 'u32[144,128]{1,0:T(1,128)}', space=vmem, size = 0x12000, scoped, tag = 'internal scratch']
  %s0 = inlined_call_operand.vmem [shape: f32[300,96], index: 0, kind: input, shape index: {}]
  %s1 = inlined_call_operand.vmem [shape: f32[96,128], index: 1, kind: input, shape index: {}]
  %s2 = inlined_call_operand.vmem [shape: f32[1,128], index: 2, kind: input, shape index: {}]
  %s3 = inlined_call_operand.hbm [shape: f32[300,128], index: 3, kind: output, shape index: {}]
  %s4 = sld [smem:[#allocation0]]
  $region45: #{tpu_custom_call.1} parent=0
    _
  %s6 = ssub.s32 1, %s4
  %s7 = scalar_select 0, %s6, %s4
  $region1: #{tpu_custom_call.1} parent=0
    #allocation2 [shape = 'u8[262144]{0}', space=vmem, size = 0x40000, scoped, tag = 'output window, operand 0']
    #allocation3 [shape = 's32[2]{0}', space=sflag, size = 0x8, scoped, tag = 'scoped memory for tpu_custom_call.1']
    %8 = vsyncpa [#allocation3], 0
    %s9 = scalar_lea.sflag [#allocation3], 1
    %10 = vsyncpa %s9, 0
    loop: start=0, step=1, limit=4
    $region2: #{tpu_custom_call.1} parent=1 // loop_pre_header
      _
    $region3: #{tpu_custom_call.1} parent=1 // loop_header
      %s12 = sphi 0, %s16
      %p13 = scmp.ge.s32.totalorder %s12, 4
      %s22 = sphi 0, %s24
      %s25 = sphi 0, %s22
      %s26 = sphi 0, %s25
      %s42 = sphi 0, %s26
      %s46 = sphi 0, %s46
      %s48 = sphi 0, %s46
      %s49 = sphi 0, %s48
      %s63 = sphi 0, %s49
      %s67 = sphi 0, %s67
      %s69 = sphi 0, %s67
      %s70 = sphi 0, %s69
      %s84 = sphi 0, %s70
      %s90 = sphi 0, %s92
      %s93 = sphi 0, %s90
      %s94 = sphi 0, %s93
      %s110 = sphi 0, %s94
    $region4: #{tpu_custom_call.1} parent=1 // loop_header_branch
      %15 = sbr.rel (%p13) target = $region8
    $region5: #{tpu_custom_call.1} parent=1 // loop_body
      %s17 = ssub.s32 %s12, 1
      %s18 = ssub.s32 %s12, 2
      %s19 = sadd.s32 %s12, 1
      %s20 = ssub.s32 %s12, %s19
      %p21 = scmp.eq.s32.totalorder %s20, 0
      %s23 = sadd.s32 %s22, 1
      %s24 = scalar_select %p21, %s22, %s23
      %p27 = pneg %p21
      %p28 = scmp.eq.s32.totalorder %s12, 1
      %p29 = por %p27, %p28
      %p30 = scmp.ne.s32.totalorder %s22, %s25
      %p31 = scmp.eq.s32.totalorder %s12, 0
      %p32 = por %p30, %p31
      %p33 = scmp.ne.s32.totalorder %s22, %s25
      %p34 = scmp.eq.s32.totalorder %s17, 1
      %p35 = por %p33, %p34
      %p36 = scmp.ne.s32.totalorder %s25, %s26
      %p37 = scmp.eq.s32.totalorder %s17, 0
      %p38 = por %p36, %p37
      %p39 = scmp.ne.s32.totalorder %s25, %s26
      %p40 = scmp.eq.s32.totalorder %s18, 1
      %p41 = por %p39, %p40
      %p43 = scmp.ne.s32.totalorder %s26, %s42
      %p44 = scmp.eq.s32.totalorder %s18, 0
      %p45 = por %p43, %p44
      %s47 = sadd.s32 %s46, 1
      %p50 = scmp.eq.s32.totalorder %s12, 1
      %p51 = scmp.ne.s32.totalorder %s46, %s48
      %p52 = scmp.eq.s32.totalorder %s12, 0
      %p53 = por %p51, %p52
      %p54 = scmp.ne.s32.totalorder %s46, %s48
      %p55 = scmp.eq.s32.totalorder %s17, 1
      %p56 = por %p54, %p55
      %p57 = scmp.ne.s32.totalorder %s48, %s49
      %p58 = scmp.eq.s32.totalorder %s17, 0
      %p59 = por %p57, %p58
      %p60 = scmp.ne.s32.totalorder %s48, %s49
      %p61 = scmp.eq.s32.totalorder %s18, 1
      %p62 = por %p60, %p61
      %p64 = scmp.ne.s32.totalorder %s49, %s63
      %p65 = scmp.eq.s32.totalorder %s18, 0
      %p66 = por %p64, %p65
      %s68 = sadd.s32 %s67, 1
      %p71 = scmp.eq.s32.totalorder %s12, 1
      %p72 = scmp.ne.s32.totalorder %s67, %s69
      %p73 = scmp.eq.s32.totalorder %s12, 0
      %p74 = por %p72, %p73
      %p75 = scmp.ne.s32.totalorder %s67, %s69
      %p76 = scmp.eq.s32.totalorder %s17, 1
      %p77 = por %p75, %p76
      %p78 = scmp.ne.s32.totalorder %s69, %s70
      %p79 = scmp.eq.s32.totalorder %s17, 0
      %p80 = por %p78, %p79
      %p81 = scmp.ne.s32.totalorder %s69, %s70
      %p82 = scmp.eq.s32.totalorder %s18, 1
      %p83 = por %p81, %p82
      %p85 = scmp.ne.s32.totalorder %s70, %s84
      %p86 = scmp.eq.s32.totalorder %s18, 0
      %p87 = por %p85, %p86
      %s88 = ssub.s32 %s12, %s19
      %p89 = scmp.eq.s32.totalorder %s88, 0
      %s91 = sadd.s32 %s90, 1
      %s92 = scalar_select %p89, %s90, %s91
      %p95 = pneg %p89
      %p96 = scmp.eq.s32.totalorder %s12, 1
      %p97 = por %p95, %p96
      %p98 = scmp.ne.s32.totalorder %s90, %s93
      %p99 = scmp.eq.s32.totalorder %s12, 0
      %p100 = por %p98, %p99
      %p101 = scmp.ne.s32.totalorder %s90, %s93
      %p102 = scmp.eq.s32.totalorder %s17, 1
      %p103 = por %p101, %p102
      %p104 = scmp.ne.s32.totalorder %s93, %s94
      %p105 = scmp.eq.s32.totalorder %s17, 0
      %p106 = por %p104, %p105
      %p107 = scmp.ne.s32.totalorder %s93, %s94
      %p108 = scmp.eq.s32.totalorder %s18, 1
      %p109 = por %p107, %p108
      %p111 = scmp.ne.s32.totalorder %s94, %s110
      %p112 = scmp.eq.s32.totalorder %s18, 0
      %p113 = por %p111, %p112
      %p114 = scmp.le.s32.totalorder 1, %s12
      %p115 = scmp.lt.s32.totalorder %s12, 3
      %p116 = pnand %p114, %p115
      %p117 = pneg %p116
      // Predicated region
      $region9: #{tpu_custom_call.1} parent=5 // pred_check
        _
      $region10: #{tpu_custom_call.1} parent=5 // pred_check_branch
        %119 = sbr.rel (%p116) target = $region12
      $region11: #{tpu_custom_call.1} parent=5 // pred_region
        %s120 = ssub.s32 %s12, 1
        // Predicated region
        $region13: #{tpu_custom_call.1} parent=11 // pred_check
          %p121 = pneg %p59
        $region14: #{tpu_custom_call.1} parent=11 // pred_check_branch
          %123 = sbr.rel (%p121) target = $region16
        $region15: #{tpu_custom_call.1} parent=11 // pred_region
          _
        $region16: #{tpu_custom_call.1} parent=11 // pred_fallthru
          _
        // Predicated region
        $region17: #{tpu_custom_call.1} parent=11 // pred_check
          %p124 = pneg %p80
        $region18: #{tpu_custom_call.1} parent=11 // pred_check_branch
          %126 = sbr.rel (%p124) target = $region20
        $region19: #{tpu_custom_call.1} parent=11 // pred_region
          _
        $region20: #{tpu_custom_call.1} parent=11 // pred_fallthru
          _
      $region12: #{tpu_custom_call.1} parent=5 // pred_fallthru
        _
      %p127 = scmp.lt.s32.totalorder %s12, 2
      // Predicated region
      $region21: #{tpu_custom_call.1} parent=5 // pred_check
        %p128 = pneg %p127
      $region22: #{tpu_custom_call.1} parent=5 // pred_check_branch
        %130 = sbr.rel (%p128) target = $region24
      $region23: #{tpu_custom_call.1} parent=5 // pred_region
        // Predicated region
        $region25: #{tpu_custom_call.1} parent=23 // pred_check
          %p131 = pneg %p32
        $region26: #{tpu_custom_call.1} parent=23 // pred_check_branch
          %133 = sbr.rel (%p131) target = $region28
        $region27: #{tpu_custom_call.1} parent=23 // pred_region
          %s134 = smul.u32 32, %s12
          %s135 = ssub.s32 38, %s134
          %p136 = scmp.lt.s32.totalorder %s135, 32
          %s137 = scalar_select %p136, %s135, 32
          %s138 = smul.u32 128, %s137
          %p139 = scmp.lt.s32.totalorder %s134, 37
          %s140 = scalar_select %p139, %s134, 37
          %s141 = smul.addr %s140, 8
          %s142 = scalar_lea.vmem %s0, %s141
          %s143 = smul.u32 32, %s12
          %s144 = ssub.s32 38, %s143
          %p145 = scmp.lt.s32.totalorder %s144, 32
          %s146 = scalar_select %p145, %s144, 32
          %s147 = smul.u32 128, %s146
        $region28: #{tpu_custom_call.1} parent=23 // pred_fallthru
          _
      $region24: #{tpu_custom_call.1} parent=5 // pred_fallthru
        _
      %p148 = scmp.le.s32.totalorder 1, %s12
      %p149 = scmp.lt.s32.totalorder %s12, 3
      %p150 = pnand %p148, %p149
      %p151 = pneg %p150
      // Predicated region
      $region29: #{tpu_custom_call.1} parent=5 // pred_check
        _
      $region30: #{tpu_custom_call.1} parent=5 // pred_check_branch
        %153 = sbr.rel (%p150) target = $region32
      $region31: #{tpu_custom_call.1} parent=5 // pred_region
        %s154 = ssub.s32 %s12, 1
        %s155 = smul.u32 32, %s17
        %s156 = ssub.s32 38, %s155
        %p157 = scmp.lt.s32.totalorder %s156, 32
        %s158 = scalar_select %p157, %s156, 32
        %s159 = smul.u32 128, %s158
        %p160 = scmp.lt.s32.totalorder %s155, 37
        %s161 = scalar_select %p160, %s155, 37
        %s162 = smul.addr %s161, 8
        %s163 = scalar_lea.vmem %s0, %s162
        %p164 = pneg %p38
        %p165 = pneg %p35
        %p166 = pneg %p59
        %p167 = pneg %p56
        %p168 = pneg %p80
        %p169 = pneg %p77
        %p170 = pneg %p106
        %p171 = pneg %p103
        %s172 = sand.u32 %s93, 1
        %s173 = scalar_lea.sflag [#allocation3], %s172
        %s174 = sand.u32 %s93, 1
        %s175 = smul.addr %s174, 256
        %s176 = scalar_lea.vmem [#allocation2], %s175
        %s177 = smul.u32 32, %s17
        %s178 = ssub.s32 38, %s177
        %p179 = scmp.lt.s32.totalorder %s178, 32
        %s180 = scalar_select %p179, %s178, 32
        %s181 = smul.u32 128, %s180
        %p182 = scmp.lt.s32.totalorder %s177, 37
        %s183 = scalar_select %p182, %s177, 37
        %s184 = smul.addr %s183, 8
        %s185 = scalar_lea.vmem %s0, %s184
        %s186 = smul.u32 32, %s17
        %s187 = ssub.s32 38, %s186
        %p188 = scmp.lt.s32.totalorder %s187, 32
        %s189 = scalar_select %p188, %s187, 32
        %s190 = smul.u32 128, %s189
        %s191 = smul.u32 32, %s17
        %s192 = ssub.s32 38, %s191
        %p193 = scmp.lt.s32.totalorder %s192, 32
        %s194 = scalar_select %p193, %s192, 32
        %s195 = smul.u32 128, %s194
        %v196 = vld [vmem:[%s185] sm:$0xff]
        %v197 = vld [vmem:[%s185 + $0x8] sm:$0xff]
        %v198 = vld [vmem:[%s185 + $0x10] sm:$0xff]
        %v199 = vld [vmem:[%s185 + $0x18] sm:$0xff]
        %v200 = vld [vmem:[%s185 + $0x20] sm:$0xff]
        %v201 = vld [vmem:[%s185 + $0x28] sm:$0xff]
        %v202 = vld [vmem:[%s185 + $0x30] sm:$0xff]
        %v203 = vld [vmem:[%s185 + $0x38] sm:$0xff]
        %v204 = vld [vmem:[%s185 + $0x40] sm:$0xff]
        %v205 = vld [vmem:[%s185 + $0x48] sm:$0xff]
        %v206 = vld [vmem:[%s185 + $0x50] sm:$0xff]
        %v207 = vld [vmem:[%s185 + $0x58] sm:$0xff]
        %v208 = vld [vmem:[%s185 + $0x60] sm:$0xff]
        %v209 = vld [vmem:[%s185 + $0x68] sm:$0xff]
        %v210 = vld [vmem:[%s185 + $0x70] sm:$0xff]
        %v211 = vld [vmem:[%s185 + $0x78] sm:$0xff]
        %v212 = vld [vmem:[%s185 + $0x80] sm:$0xff]
        %v213 = vld [vmem:[%s185 + $0x88] sm:$0xff]
        %v214 = vld [vmem:[%s185 + $0x90] sm:$0xff]
        %v215 = vld [vmem:[%s185 + $0x98] sm:$0xff]
        %v216 = vld [vmem:[%s185 + $0xa0] sm:$0xff]
        %v217 = vld [vmem:[%s185 + $0xa8] sm:$0xff]
        %v218 = vld [vmem:[%s185 + $0xb0] sm:$0xff]
        %v219 = vld [vmem:[%s185 + $0xb8] sm:$0xff]
        %v220 = vld [vmem:[%s185 + $0xc0] sm:$0xff]
        %v221 = vld [vmem:[%s185 + $0xc8] sm:$0xff]
        %v222 = vld [vmem:[%s185 + $0xd0] sm:$0xff]
        %v223 = vld [vmem:[%s185 + $0xd8] sm:$0xff]
        %v224 = vld [vmem:[%s185 + $0xe0] sm:$0xff]
        %v225 = vld [vmem:[%s185 + $0xe8] sm:$0xff]
        %v226 = vld [vmem:[%s185 + $0xf0] sm:$0xff]
        %v227 = vld [vmem:[%s185 + $0xf8] sm:$0xff]
        %v228 = vld [vmem:[%s1] sm:$0xff]
        %v229 = vld [vmem:[%s1 + $0x8] sm:$0xff]
        %v230 = vld [vmem:[%s1 + $0x10] sm:$0xff]
        %v231 = vld [vmem:[%s1 + $0x18] sm:$0xff]
        %v232 = vld [vmem:[%s1 + $0x20] sm:$0xff]
        %v233 = vld [vmem:[%s1 + $0x28] sm:$0xff]
        %v234 = vld [vmem:[%s1 + $0x30] sm:$0xff]
        %v235 = vld [vmem:[%s1 + $0x38] sm:$0xff]
        %v236 = vld [vmem:[%s1 + $0x40] sm:$0xff]
        %v237 = vld [vmem:[%s1 + $0x48] sm:$0xff]
        %v238 = vld [vmem:[%s1 + $0x50] sm:$0xff]
        %v239 = vld [vmem:[%s1 + $0x58] sm:$0xff]
        %v240 = vld [vmem:[%s2] sm:$0x1]
        %v242 = vlaneseq
        %v243 = vshrl.u32 %v242, 7
        %v244 = vsub.s32 0, %v243
        %v245 = vrot.slane %v240, %v244
        %vm247 = vcmask 785408
        %v249 = vsel %vm247, %v196, 0
        %v252 = vsel %vm247, %v197, 0
        %v255 = vsel %vm247, %v198, 0
        %v258 = vsel %vm247, %v199, 0
        %v261 = vsel %vm247, %v200, 0
        %v264 = vsel %vm247, %v201, 0
        %v267 = vsel %vm247, %v202, 0
        %v270 = vsel %vm247, %v203, 0
        %v273 = vsel %vm247, %v204, 0
        %v276 = vsel %vm247, %v205, 0
        %v279 = vsel %vm247, %v206, 0
        %v282 = vsel %vm247, %v207, 0
        %v285 = vsel %vm247, %v208, 0
        %v288 = vsel %vm247, %v209, 0
        %v291 = vsel %vm247, %v210, 0
        %v294 = vsel %vm247, %v211, 0
        %v297 = vsel %vm247, %v212, 0
        %v300 = vsel %vm247, %v213, 0
        %v303 = vsel %vm247, %v214, 0
        %v306 = vsel %vm247, %v215, 0
        %v309 = vsel %vm247, %v216, 0
        %v312 = vsel %vm247, %v217, 0
        %v315 = vsel %vm247, %v218, 0
        %v318 = vsel %vm247, %v219, 0
        %v321 = vsel %vm247, %v220, 0
        %v324 = vsel %vm247, %v221, 0
        %v327 = vsel %vm247, %v222, 0
        %v330 = vsel %vm247, %v223, 0
        %v333 = vsel %vm247, %v224, 0
        %v336 = vsel %vm247, %v225, 0
        %v339 = vsel %vm247, %v226, 0
        %v342 = vsel %vm247, %v227, 0
        %344 = vmatprep.subr.mxu0 0.0
        %345 = vmatpush1.msra.mxu0 %v228
        %346 = vmatprep.subr.mxu0 0.0
        %347 = vmatpush1.msra.mxu0 %v229
        %348 = vmatprep.subr.mxu0 0.0
        %349 = vmatpush1.msra.mxu0 %v230
        %350 = vmatprep.subr.mxu0 0.0
        %351 = vmatpush1.msra.mxu0 %v231
        %352 = vmatprep.subr.mxu0 0.0
        %353 = vmatpush1.msra.mxu0 %v232
        %354 = vmatprep.subr.mxu0 0.0
        %355 = vmatpush1.msra.mxu0 %v233
        %356 = vmatprep.subr.mxu0 0.0
        %357 = vmatpush1.msra.mxu0 %v234
        %358 = vmatprep.subr.mxu0 0.0
        %359 = vmatpush1.msra.mxu0 %v235
        %360 = vmatprep.subr.mxu0 0.0
        %361 = vmatpush1.msra.mxu0 %v236
        %362 = vmatprep.subr.mxu0 0.0
        %363 = vmatpush1.msra.mxu0 %v237
        %364 = vmatprep.subr.mxu0 0.0
        %365 = vmatpush1.msra.mxu0 %v238
        %366 = vmatprep.subr.mxu0 0.0
        %367 = vmatpush1.msra.mxu0 %v239
        %368 = vmatprep.subr.mxu0 0.0
        %369 = vmatpush1.msra.mxu0 0.0
        %370 = vmatprep.subr.mxu0 0.0
        %371 = vmatpush1.msra.mxu0 0.0
        %372 = vmatprep.subr.mxu0 0.0
        %373 = vmatpush1.msra.mxu0 0.0
        %374 = vmatprep.subr.mxu0 0.0
        %375 = vmatpush1.msra.mxu0 0.0
        %376 = vmatprep.subr.mxu0 0.0
        %377 = vmatpush1.msra.mxu0 0.0
        %378 = vmatprep.subr.mxu0 0.0
        %379 = vmatpush1.msra.mxu0 0.0
        %380 = vmatprep.subr.mxu0 0.0
        %381 = vmatpush1.msra.mxu0 0.0
        %382 = vmatprep.subr.mxu0 0.0
        %383 = vmatpush1.msra.mxu0 0.0
        %384 = vmatprep.subr.mxu0 0.0
        %385 = vmatpush1.msra.mxu0 0.0
        %386 = vmatprep.subr.mxu0 0.0
        %387 = vmatpush1.msra.mxu0 0.0
        %388 = vmatprep.subr.mxu0 0.0
        %389 = vmatpush1.msra.mxu0 0.0
        %390 = vmatprep.subr.mxu0 0.0
        %391 = vmatpush1.msra.mxu0 0.0
        %392 = vmatprep.subr.mxu0 0.0
        %393 = vmatpush1.msra.mxu0 0.0
        %394 = vmatprep.subr.mxu0 0.0
        %395 = vmatpush1.msra.mxu0 0.0
        %396 = vmatprep.subr.mxu0 0.0
        %397 = vmatpush1.msra.mxu0 0.0
        %398 = vmatprep.subr.mxu0 0.0
        %399 = vmatpush1.msra.mxu0 0.0
        %400 = vmatprep.subr.mxu0 0.0
        %401 = vmatpush1.msra.mxu0 0.0
        %402 = vmatprep.subr.mxu0 0.0
        %403 = vmatpush1.msra.mxu0 0.0
        %404 = vmatprep.subr.mxu0 0.0
        %405 = vmatpush1.msra.mxu0 0.0
        %406 = vmatprep.subr.mxu0 0.0
        %407 = vmatpush1.msra.mxu0 0.0
        %408 = vmatprep.mubr.f32.mxu0 0.0
        %409 = vmatmul.mubr.f32.gmra.mrb[0].mxu0 %v249
        %v410 = vpop.f32.mrb[0].mxu0
        %v411 = vadd.f32 %v245, %v410
        %v412 = vpop.f32.mrb[0].mxu0
        %413 = vmatprep.mubr.f32.mxu0 0.0
        %414 = vmatmul.mubr.f32.gmra.mrb[0].mxu0 %v252
        %v415 = vpop.f32.mrb[0].mxu0
        %v416 = vadd.f32 %v245, %v415
        %v417 = vpop.f32.mrb[0].mxu0
        %418 = vmatprep.mubr.f32.mxu0 0.0
        %419 = vmatmul.mubr.f32.gmra.mrb[0].mxu0 %v255
        %v420 = vpop.f32.mrb[0].mxu0
        %v421 = vadd.f32 %v245, %v420
        %v422 = vpop.f32.mrb[0].mxu0
        %423 = vmatprep.mubr.f32.mxu0 0.0
        %424 = vmatmul.mubr.f32.gmra.mrb[0].mxu0 %v258
        %v425 = vpop.f32.mrb[0].mxu0
        %v426 = vadd.f32 %v245, %v425
        %v427 = vpop.f32.mrb[0].mxu0
        %428 = vmatprep.mubr.f32.mxu0 0.0
        %429 = vmatmul.mubr.f32.gmra.mrb[0].mxu0 %v261
        %v430 = vpop.f32.mrb[0].mxu0
        %v431 = vadd.f32 %v245, %v430
        %v432 = vpop.f32.mrb[0].mxu0
        %433 = vmatprep.mubr.f32.mxu0 0.0
        %434 = vmatmul.mubr.f32.gmra.mrb[0].mxu0 %v264
        %v435 = vpop.f32.mrb[0].mxu0
        %v436 = vadd.f32 %v245, %v435
        %v437 = vpop.f32.mrb[0].mxu0
        %438 = vmatprep.mubr.f32.mxu0 0.0
        %439 = vmatmul.mubr.f32.gmra.mrb[0].mxu0 %v267
        %v440 = vpop.f32.mrb[0].mxu0
        %v441 = vadd.f32 %v245, %v440
        %v442 = vpop.f32.mrb[0].mxu0
        %443 = vmatprep.mubr.f32.mxu0 0.0
        %444 = vmatmul.mubr.f32.gmra.mrb[0].mxu0 %v270
        %v445 = vpop.f32.mrb[0].mxu0
        %v446 = vadd.f32 %v245, %v445
        %v447 = vpop.f32.mrb[0].mxu0
        %448 = vmatprep.mubr.f32.mxu0 0.0
        %449 = vmatmul.mubr.f32.gmra.mrb[0].mxu0 %v273
        %v450 = vpop.f32.mrb[0].mxu0
        %v451 = vadd.f32 %v245, %v450
        %v452 = vpop.f32.mrb[0].mxu0
        %453 = vmatprep.mubr.f32.mxu0 0.0
        %454 = vmatmul.mubr.f32.gmra.mrb[0].mxu0 %v276
        %v455 = vpop.f32.mrb[0].mxu0
        %v456 = vadd.f32 %v245, %v455
        %v457 = vpop.f32.mrb[0].mxu0
        %458 = vmatprep.mubr.f32.mxu0 0.0
        %459 = vmatmul.mubr.f32.gmra.mrb[0].mxu0 %v279
        %v460 = vpop.f32.mrb[0].mxu0
        %v461 = vadd.f32 %v245, %v460
        %v462 = vpop.f32.mrb[0].mxu0
        %463 = vmatprep.mubr.f32.mxu0 0.0
        %464 = vmatmul.mubr.f32.gmra.mrb[0].mxu0 %v282
        %v465 = vpop.f32.mrb[0].mxu0
        %v466 = vadd.f32 %v245, %v465
        %v467 = vpop.f32.mrb[0].mxu0
        %468 = vmatprep.mubr.f32.mxu0 0.0
        %469 = vmatmul.mubr.f32.gmra.mrb[0].mxu0 %v285
        %v470 = vpop.f32.mrb[0].mxu0
        %v471 = vadd.f32 %v245, %v470
        %v472 = vpop.f32.mrb[0].mxu0
        %473 = vmatprep.mubr.f32.mxu0 0.0
        %474 = vmatmul.mubr.f32.gmra.mrb[0].mxu0 %v288
        %v475 = vpop.f32.mrb[0].mxu0
        %v476 = vadd.f32 %v245, %v475
        %v477 = vpop.f32.mrb[0].mxu0
        %478 = vmatprep.mubr.f32.mxu0 0.0
        %479 = vmatmul.mubr.f32.gmra.mrb[0].mxu0 %v291
        %v480 = vpop.f32.mrb[0].mxu0
        %v481 = vadd.f32 %v245, %v480
        %v482 = vpop.f32.mrb[0].mxu0
        %483 = vmatprep.mubr.f32.mxu0 0.0
        %484 = vmatmul.mubr.f32.gmra.mrb[0].mxu0 %v294
        %v485 = vpop.f32.mrb[0].mxu0
        %v486 = vadd.f32 %v245, %v485
        %v487 = vpop.f32.mrb[0].mxu0
        %488 = vmatprep.mubr.f32.mxu0 0.0
        %489 = vmatmul.mubr.f32.gmra.mrb[0].mxu0 %v297
        %v490 = vpop.f32.mrb[0].mxu0
        %v491 = vadd.f32 %v245, %v490
        %v492 = vpop.f32.mrb[0].mxu0
        %493 = vmatprep.mubr.f32.mxu0 0.0
        %494 = vmatmul.mubr.f32.gmra.mrb[0].mxu0 %v300
        %v495 = vpop.f32.mrb[0].mxu0
        %v496 = vadd.f32 %v245, %v495
        %v497 = vpop.f32.mrb[0].mxu0
        %498 = vmatprep.mubr.f32.mxu0 0.0
        %499 = vmatmul.mubr.f32.gmra.mrb[0].mxu0 %v303
        %v500 = vpop.f32.mrb[0].mxu0
        %v501 = vadd.f32 %v245, %v500
        %v502 = vpop.f32.mrb[0].mxu0
        %503 = vmatprep.mubr.f32.mxu0 0.0
        %504 = vmatmul.mubr.f32.gmra.mrb[0].mxu0 %v306
        %v505 = vpop.f32.mrb[0].mxu0
        %v506 = vadd.f32 %v245, %v505
        %v507 = vpop.f32.mrb[0].mxu0
        %508 = vmatprep.mubr.f32.mxu0 0.0
        %509 = vmatmul.mubr.f32.gmra.mrb[0].mxu0 %v309
        %v510 = vpop.f32.mrb[0].mxu0
        %v511 = vadd.f32 %v245, %v510
        %v512 = vpop.f32.mrb[0].mxu0
        %513 = vmatprep.mubr.f32.mxu0 0.0
        %514 = vmatmul.mubr.f32.gmra.mrb[0].mxu0 %v312
        %v515 = vpop.f32.mrb[0].mxu0
        %v516 = vadd.f32 %v245, %v515
        %v517 = vpop.f32.mrb[0].mxu0
        %518 = vmatprep.mubr.f32.mxu0 0.0
        %519 = vmatmul.mubr.f32.gmra.mrb[0].mxu0 %v315
        %v520 = vpop.f32.mrb[0].mxu0
        %v521 = vadd.f32 %v245, %v520
        %v522 = vpop.f32.mrb[0].mxu0
        %523 = vmatprep.mubr.f32.mxu0 0.0
        %524 = vmatmul.mubr.f32.gmra.mrb[0].mxu0 %v318
        %v525 = vpop.f32.mrb[0].mxu0
        %v526 = vadd.f32 %v245, %v525
        %v527 = vpop.f32.mrb[0].mxu0
        %528 = vmatprep.mubr.f32.mxu0 0.0
        %529 = vmatmul.mubr.f32.gmra.mrb[0].mxu0 %v321
        %v530 = vpop.f32.mrb[0].mxu0
        %v531 = vadd.f32 %v245, %v530
        %v532 = vpop.f32.mrb[0].mxu0
        %533 = vmatprep.mubr.f32.mxu0 0.0
        %534 = vmatmul.mubr.f32.gmra.mrb[0].mxu0 %v324
        %v535 = vpop.f32.mrb[0].mxu0
        %v536 = vadd.f32 %v245, %v535
        %v537 = vpop.f32.mrb[0].mxu0
        %538 = vmatprep.mubr.f32.mxu0 0.0
        %539 = vmatmul.mubr.f32.gmra.mrb[0].mxu0 %v327
        %v540 = vpop.f32.mrb[0].mxu0
        %v541 = vadd.f32 %v245, %v540
        %v542 = vpop.f32.mrb[0].mxu0
        %543 = vmatprep.mubr.f32.mxu0 0.0
        %544 = vmatmul.mubr.f32.gmra.mrb[0].mxu0 %v330
        %v545 = vpop.f32.mrb[0].mxu0
        %v546 = vadd.f32 %v245, %v545
        %v547 = vpop.f32.mrb[0].mxu0
        %548 = vmatprep.mubr.f32.mxu0 0.0
        %549 = vmatmul.mubr.f32.gmra.mrb[0].mxu0 %v333
        %v550 = vpop.f32.mrb[0].mxu0
        %v551 = vadd.f32 %v245, %v550
        %v552 = vpop.f32.mrb[0].mxu0
        %553 = vmatprep.mubr.f32.mxu0 0.0
        %554 = vmatmul.mubr.f32.gmra.mrb[0].mxu0 %v336
        %v555 = vpop.f32.mrb[0].mxu0
        %v556 = vadd.f32 %v245, %v555
        %v557 = vpop.f32.mrb[0].mxu0
        %558 = vmatprep.mubr.f32.mxu0 0.0
        %559 = vmatmul.mubr.f32.gmra.mrb[0].mxu0 %v339
        %v560 = vpop.f32.mrb[0].mxu0
        %v561 = vadd.f32 %v245, %v560
        %v562 = vpop.f32.mrb[0].mxu0
        %563 = vmatprep.mubr.f32.mxu0 0.0
        %564 = vmatmul.mubr.f32.gmra.mrb[0].mxu0 %v342
        %v565 = vpop.f32.mrb[0].mxu0
        %v566 = vadd.f32 %v245, %v565
        %v567 = vpop.f32.mrb[0].mxu0
        %568 = vdwg.mxu0
        %569 = vst [vmem:[%s176] sm:$0xff] %v411
        %570 = vst [vmem:[%s176 + $0x8] sm:$0xff] %v416
        %571 = vst [vmem:[%s176 + $0x10] sm:$0xff] %v421
        %572 = vst [vmem:[%s176 + $0x18] sm:$0xff] %v426
        %573 = vst [vmem:[%s176 + $0x20] sm:$0xff] %v431
        %574 = vst [vmem:[%s176 + $0x28] sm:$0xff] %v436
        %575 = vst [vmem:[%s176 + $0x30] sm:$0xff] %v441
        %576 = vst [vmem:[%s176 + $0x38] sm:$0xff] %v446
        %577 = vst [vmem:[%s176 + $0x40] sm:$0xff] %v451
        %578 = vst [vmem:[%s176 + $0x48] sm:$0xff] %v456
        %579 = vst [vmem:[%s176 + $0x50] sm:$0xff] %v461
        %580 = vst [vmem:[%s176 + $0x58] sm:$0xff] %v466
        %581 = vst [vmem:[%s176 + $0x60] sm:$0xff] %v471
        %582 = vst [vmem:[%s176 + $0x68] sm:$0xff] %v476
        %583 = vst [vmem:[%s176 + $0x70] sm:$0xff] %v481
        %584 = vst [vmem:[%s176 + $0x78] sm:$0xff] %v486
        %585 = vst [vmem:[%s176 + $0x80] sm:$0xff] %v491
        %586 = vst [vmem:[%s176 + $0x88] sm:$0xff] %v496
        %587 = vst [vmem:[%s176 + $0x90] sm:$0xff] %v501
        %588 = vst [vmem:[%s176 + $0x98] sm:$0xff] %v506
        %589 = vst [vmem:[%s176 + $0xa0] sm:$0xff] %v511
        %590 = vst [vmem:[%s176 + $0xa8] sm:$0xff] %v516
        %591 = vst [vmem:[%s176 + $0xb0] sm:$0xff] %v521
        %592 = vst [vmem:[%s176 + $0xb8] sm:$0xff] %v526
        %593 = vst [vmem:[%s176 + $0xc0] sm:$0xff] %v531
        %594 = vst [vmem:[%s176 + $0xc8] sm:$0xff] %v536
        %595 = vst [vmem:[%s176 + $0xd0] sm:$0xff] %v541
        %596 = vst [vmem:[%s176 + $0xd8] sm:$0xff] %v546
        %597 = vst [vmem:[%s176 + $0xe0] sm:$0xff] %v551
        %598 = vst [vmem:[%s176 + $0xe8] sm:$0xff] %v556
        %599 = vst [vmem:[%s176 + $0xf0] sm:$0xff] %v561
        %600 = vst [vmem:[%s176 + $0xf8] sm:$0xff] %v566
        %s601 = sand.u32 %s93, 1
        %s602 = scalar_lea.sflag [#allocation3], %s601
        %s603 = sand.u32 %s93, 1
        %s604 = smul.addr %s603, 256
        %s605 = scalar_lea.vmem [#allocation2], %s604
        // Predicated region
        $region33: #{tpu_custom_call.1} parent=31 // pred_check
          %p606 = pneg %p103
        $region34: #{tpu_custom_call.1} parent=31 // pred_check_branch
          %608 = sbr.rel (%p606) target = $region36
        $region35: #{tpu_custom_call.1} parent=31 // pred_region
          %s609 = smul.u32 32, %s17
          %s610 = ssub.s32 38, %s609
          %p611 = scmp.lt.s32.totalorder %s610, 32
          %s612 = scalar_select %p611, %s610, 32
          %s613 = smul.u32 128, %s612
          %s615 = ssub.s32 4096, %s613
          %616 = vsyncadd %s602, %s615
          %p617 = scmp.ne.s32.totalorder 0, %s613
          %s618 = smul.addr %s609, 128
          %s619 = scalar_lea.hbm %s3, %s618
          %s620 = smul.u32 8, %s612
          %s621 = sshll.u32 %s605, 4
          %s622 = int_to_ptr.vmem [resolvable:$true] %s621
          %s623 = sshll.u32 %s620, 4
          %627 = dma.vmem_to_hbm [thread:$0]  (%p617), %s622, %s623, %s619, %s602, 128, 128, 8
        $region36: #{tpu_custom_call.1} parent=31 // pred_fallthru
          _
      $region32: #{tpu_custom_call.1} parent=5 // pred_fallthru
        _
      %p628 = scmp.le.s32.totalorder 2, %s12
      // Predicated region
      $region37: #{tpu_custom_call.1} parent=5 // pred_check
        %p629 = pneg %p628
      $region38: #{tpu_custom_call.1} parent=5 // pred_check_branch
        %631 = sbr.rel (%p629) target = $region40
      $region39: #{tpu_custom_call.1} parent=5 // pred_region
        %s632 = ssub.s32 %s12, 2
        // Predicated region
        $region41: #{tpu_custom_call.1} parent=39 // pred_check
          %p633 = pneg %p109
        $region42: #{tpu_custom_call.1} parent=39 // pred_check_branch
          %635 = sbr.rel (%p633) target = $region44
        $region43: #{tpu_custom_call.1} parent=39 // pred_region
          %s636 = sand.u32 %s94, 1
          %s637 = scalar_lea.sflag [#allocation3], %s636
          %s638 = sand.u32 %s94, 1
          %s639 = smul.addr %s638, 256
          %s640 = scalar_lea.vmem [#allocation2], %s639
          %641 = dma.done %s637, 4096
        $region44: #{tpu_custom_call.1} parent=39 // pred_fallthru
          _
      $region40: #{tpu_custom_call.1} parent=5 // pred_fallthru
        _
    $region6: #{tpu_custom_call.1} parent=1 // loop_footer
      %s16 = sadd.s32 1, %s12
    $region7: #{tpu_custom_call.1} parent=1 // loop_footer_branch
      %11 = sbr.rel target = $region3
    $region8: #{tpu_custom_call.1} parent=1 // loop_exit
      _
    %642 = vsyncpa [#allocation3], 1
    %s643 = scalar_lea.sflag [#allocation3], 1
    %644 = vsyncpa %s643, 1

</llo_original>
